<compile_context>
chip_gen: v6e
topology: v6e:2x2x1
jax: 0.10.0
libtpu: 0.0.40
codegen_flags: <defaults>
</compile_context>

<pallas_src>
import jax
import jax.numpy as jnp
from jax.experimental import pallas as pl
from jax.experimental.pallas import tpu as pltpu


def _round_up(x, m):
    return (x + m - 1) // m * m


def _mc_ebc_fused_kernel(sizes_ref, ids_ref, table_ref, pooled_ref, remapped_ref):
    """Fused managed-collision remap + embedding-bag sum pooling.

    Grid: (key, batch_tile).  Per step:
      sizes_ref    : SMEM [K] int32   -- per-key num_embeddings (scalar prefetch)
      ids_ref      : VMEM [1, TB, L]  -- ids, padded jagged slots are -1
      table_ref    : VMEM [1, N_pad, D_pad] bf16 -- zero-padded table
      pooled_ref   : VMEM [1, TB, D_pad] f32     -- lane-dense pooled output
      remapped_ref : VMEM [1, TB, L] int32       -- remapped ids (-1 on padding)
    """
    k = pl.program_id(0)
    n_k = sizes_ref[k]                       # this key's num_embeddings
    ids = ids_ref[0]                         # [TB, L]

    # --- managed-collision remapping (hoisted, once per tile) --------------
    # Python/PyTorch-style modulo on valid slots; padded slots stay -1 so they
    # never match any one-hot column below (mask folded into the ids).
    valid = ids >= 0
    remapped = jnp.where(valid, jnp.remainder(ids, n_k), jnp.int32(-1))
    remapped_ref[0] = remapped

    # --- embedding-bag lookup + sum pooling as counts @ table --------------
    # counts[b, n] = #{l : remapped[b, l] == n}; compare + add only (VPU).
    TB, L = ids.shape
    N = table_ref.shape[1]
    col = jax.lax.broadcasted_iota(jnp.int32, (TB, N), 1)
    counts = jnp.zeros((TB, N), jnp.float32)     # f32 VPU math (v5e-friendly)
    for l in range(L):                           # L small & static (use
        counts = counts + (col == remapped[:, l:l + 1]).astype(jnp.float32)
        # lax.fori_loop(..., unroll=k) if L ever grows beyond ~16.

    # MXU at bf16 rate with f32 accumulation (counts are small exact ints).
    pooled_ref[0] = jnp.dot(counts.astype(jnp.bfloat16), table_ref[0],
                            preferred_element_type=jnp.float32)


def managed_collision_ebc_forward(features, tables, return_remapped_features=True):
    """features: dict key -> (ids_dense[B, L] int32, mask[B, L] f32);
    tables: dict key -> [N_k, D_k] f32.

    Returns (KeyedTensor-like [B, sum(dims)] f32, remapped features dict or None).
    Mirrors BaseManagedCollisionEmbeddingCollection.forward.
    """
    keys = list(tables.keys())
    K = len(keys)
    Ns = [int(tables[k].shape[0]) for k in keys]
    Ds = [int(tables[k].shape[1]) for k in keys]
    B, L = features[keys[0]][0].shape

    # Padded, fused layout: lane-dense table/output slabs, sublane-aligned B.
    N_pad = _round_up(max(Ns), 8)
    D_pad = _round_up(max(Ds), 128)
    if B <= 128:
        B_pad, TB = _round_up(B, 8), _round_up(B, 8)
    else:
        B_pad, TB = _round_up(B, 128), 128

    # --- host-side prep (in practice done once, not per forward) ------------
    tables_stacked = jnp.stack([
        jnp.pad(tables[k].astype(jnp.bfloat16),
                ((0, N_pad - tables[k].shape[0]), (0, D_pad - tables[k].shape[1])))
        for k in keys])                                   # [K, N_pad, D_pad] bf16

    def _prep_ids(ids, mask):
        ids_k = jnp.where(mask > 0, ids.astype(jnp.int32), jnp.int32(-1))
        if B_pad > B:
            ids_k = jnp.pad(ids_k, ((0, B_pad - B), (0, 0)), constant_values=-1)
        return ids_k

    ids_stacked = jnp.stack([_prep_ids(*features[k]) for k in keys])  # [K,B_pad,L]
    sizes = jnp.asarray(Ns, dtype=jnp.int32)                          # [K]

    pooled_pad, remapped_pad = pl.pallas_call(
        _mc_ebc_fused_kernel,
        out_shape=(jax.ShapeDtypeStruct((K, B_pad, D_pad), jnp.float32),
                   jax.ShapeDtypeStruct((K, B_pad, L), jnp.int32)),
        grid_spec=pltpu.PrefetchScalarGridSpec(
            num_scalar_prefetch=1,
            grid=(K, B_pad // TB),
            in_specs=[
                pl.BlockSpec((1, TB, L), lambda k, b, szs: (k, b, 0)),
                pl.BlockSpec((1, N_pad, D_pad), lambda k, b, szs: (k, 0, 0)),
            ],
            out_specs=(
                pl.BlockSpec((1, TB, D_pad), lambda k, b, szs: (k, b, 0)),
                pl.BlockSpec((1, TB, L), lambda k, b, szs: (k, b, 0)),
            ),
        ),
        compiler_params=pltpu.CompilerParams(
            dimension_semantics=("parallel", "parallel")),
    )(sizes, ids_stacked, tables_stacked)

    # KeyedTensor-like dense [B, sum(dims)] (strip lane/batch padding per key).
    keyed_tensor = jnp.concatenate(
        [pooled_pad[i, :B, :Ds[i]] for i in range(K)], axis=-1)

    # evict() of the reference module is a no-op -> nothing to apply.
    # TODO(synk): stateful MCH eviction / in-place embedding-weight update is
    # training-time bookkeeping with no Pallas-forward equivalent; omitted.
    if not return_remapped_features:
        return keyed_tensor, None
    remapped_features = {k: remapped_pad[i, :B, :] for i, k in enumerate(keys)}
    return keyed_tensor, remapped_features


def _reference(features, tables):
    """Pure-JAX reference (uses the same bf16-rounded tables as the kernel)."""
    outs = []
    for key in tables:
        ids, mask = features[key]
        table = tables[key].astype(jnp.bfloat16).astype(jnp.float32)
        N = table.shape[0]
        remapped = ids % N
        gathered = table[remapped] * mask[..., None]  # [B, L, D]
        outs.append(gathered.sum(axis=1))
    return jnp.concatenate(outs, axis=-1)


if __name__ == "__main__":
    key = jax.random.PRNGKey(0)
    B, L = 8, 8  # batch size, max jagged length per sample

    # Two embedding tables (EmbeddingBagCollection configs).
    table_cfg = {"t0": (128, 64), "t1": (64, 32)}  # key -> (num_embeddings, dim)
    k_t0, k_t1, k_ids0, k_ids1, k_len0, k_len1 = jax.random.split(key, 6)
    tables = {
        "t0": jax.random.normal(k_t0, table_cfg["t0"], dtype=jnp.float32) * 0.05,
        "t1": jax.random.normal(k_t1, table_cfg["t1"], dtype=jnp.float32) * 0.05,
    }

    # Synthetic jagged features: raw ids drawn from a LARGER range than the
    # table (so the managed-collision modulo remap actually does something),
    # with per-sample lengths <= L.
    def make_feature(k_ids, k_len, raw_range):
        ids = jax.random.randint(k_ids, (B, L), 0, raw_range, dtype=jnp.int32)
        lengths = jax.random.randint(k_len, (B,), 1, L + 1, dtype=jnp.int32)
        pos = jnp.arange(L, dtype=jnp.int32)[None, :]
        mask = (pos < lengths[:, None]).astype(jnp.float32)
        ids = ids * mask.astype(jnp.int32)  # zero out padded slots
        return ids, mask

    features = {
        "t0": make_feature(k_ids0, k_len0, 10_000),
        "t1": make_feature(k_ids1, k_len1, 5_000),
    }

    pooled, remapped = managed_collision_ebc_forward(
        features, tables, return_remapped_features=True
    )
    pooled = jax.block_until_ready(pooled)
    remapped = jax.tree_util.tree_map(jax.block_until_ready, remapped)

    ref = _reference(features, tables)
    assert pooled.shape == (B, sum(d for _, d in table_cfg.values()))
    assert jnp.allclose(pooled, ref, atol=1e-4, rtol=1e-4), "mismatch vs reference"
    for k in tables:
        N = tables[k].shape[0]
        ids_k, mask_k = features[k]
        expect = jnp.where(mask_k > 0, ids_k % N, -1)  # padded slots -> -1
        assert jnp.array_equal(remapped[k], expect)

    print("KERNEL_OK")
</pallas_src>

<mosaic_0001>
module attributes {stable_mosaic.version = 11 : i64} {
  func.func @_mc_ebc_fused_kernel(%arg0: i32, %arg1: i32, %arg2: memref<2xi32, #tpu.memory_space<smem>>, %arg3: memref<1x8x8xi32, #tpu.memory_space<vmem>>, %arg4: memref<1x128x128xbf16, #tpu.memory_space<vmem>>, %arg5: memref<1x8x128xf32, #tpu.memory_space<vmem>>, %arg6: memref<1x8x8xi32, #tpu.memory_space<vmem>>) attributes {dimension_semantics = [#tpu.dimension_semantics<parallel>, #tpu.dimension_semantics<parallel>], iteration_bounds = array<i64: 2, 1>, scalar_prefetch = 1 : i64, scratch_operands = 0 : i64, tpu.core_type = #tpu.core_type<tc>, window_params = [{transform_indices = @transform_0, window_bounds = array<i64: 1, 8, 8>}, {transform_indices = @transform_1, window_bounds = array<i64: 1, 128, 128>}, {transform_indices = @transform_2, window_bounds = array<i64: 1, 8, 128>}, {transform_indices = @transform_3, window_bounds = array<i64: 1, 8, 8>}]} {
    %0 = arith.index_cast %arg0 : i32 to index
    %1 = memref.load %arg2[%0] : memref<2xi32, #tpu.memory_space<smem>>
    %c0 = arith.constant 0 : index
    %c0_0 = arith.constant 0 : index
    %c0_1 = arith.constant 0 : index
    %2 = vector.load %arg3[%c0, %c0_0, %c0_1] : memref<1x8x8xi32, #tpu.memory_space<vmem>>, vector<1x8x8xi32>
    %3 = vector.shape_cast %2 : vector<1x8x8xi32> to vector<8x8xi32>
    %c0_i32 = arith.constant 0 : i32
    %4 = vector.broadcast %c0_i32 : i32 to vector<8x8xi32>
    %5 = arith.cmpi sge, %3, %4 : vector<8x8xi32>
    %c0_i32_2 = arith.constant 0 : i32
    %6 = arith.cmpi eq, %1, %c0_i32_2 : i32
    %c1_i32 = arith.constant 1 : i32
    %7 = arith.select %6, %c1_i32, %1 : i32
    %8 = vector.broadcast %7 : i32 to vector<8x8xi32>
    %9 = arith.remsi %3, %8 : vector<8x8xi32>
    %c0_i32_3 = arith.constant 0 : i32
    %10 = vector.broadcast %c0_i32_3 : i32 to vector<8x8xi32>
    %11 = arith.cmpi ne, %9, %10 : vector<8x8xi32>
    %c0_i32_4 = arith.constant 0 : i32
    %12 = vector.broadcast %c0_i32_4 : i32 to vector<8x8xi32>
    %13 = arith.cmpi slt, %9, %12 : vector<8x8xi32>
    %c0_i32_5 = arith.constant 0 : i32
    %14 = arith.cmpi slt, %7, %c0_i32_5 : i32
    %15 = vector.broadcast %14 : i1 to vector<8x8xi1>
    %16 = vector.broadcast %15 : vector<8x8xi1> to vector<8x8xi1>
    %17 = arith.xori %13, %16 : vector<8x8xi1>
    %18 = arith.andi %17, %11 : vector<8x8xi1>
    %19 = vector.broadcast %7 : i32 to vector<8x8xi32>
    %20 = arith.addi %9, %19 : vector<8x8xi32>
    %21 = arith.select %18, %20, %9 : vector<8x8xi1>, vector<8x8xi32>
    %c-1_i32 = arith.constant -1 : i32
    %22 = vector.broadcast %c-1_i32 : i32 to vector<8x8xi32>
    %23 = arith.select %5, %21, %22 : vector<8x8xi1>, vector<8x8xi32>
    %c0_6 = arith.constant 0 : index
    %c0_7 = arith.constant 0 : index
    %c0_8 = arith.constant 0 : index
    %24 = vector.load %arg6[%c0_6, %c0_7, %c0_8] : memref<1x8x8xi32, #tpu.memory_space<vmem>>, vector<1x8x8xi32>
    %25 = vector.shape_cast %24 : vector<1x8x8xi32> to vector<8x8xi32>
    %26 = vector.shape_cast %23 : vector<8x8xi32> to vector<1x8x8xi32>
    tpu.vector_store %arg6[%c0_6, %c0_7, %c0_8], %26 {strides = array<i32>} : memref<1x8x8xi32, #tpu.memory_space<vmem>>, vector<1x8x8xi32>,
    %27 = tpu.iota {dimensions = array<i32: 1>} : vector<8x128xi32>
    %cst = arith.constant 0.000000e+00 : f32
    %28 = vector.broadcast %cst : f32 to vector<8x128xf32>
    %29 = vector.extract_strided_slice %23 {offsets = [0, 0], sizes = [8, 1], strides = [1, 1]} : vector<8x8xi32> to vector<8x1xi32>
    %30 = vector.broadcast %29 : vector<8x1xi32> to vector<8x128xi32>
    %31 = arith.cmpi eq, %27, %30 : vector<8x128xi32>
    %32 = arith.extui %31 : vector<8x128xi1> to vector<8x128xi32>
    %33 = arith.sitofp %32 : vector<8x128xi32> to vector<8x128xf32>
    %34 = arith.addf %28, %33 : vector<8x128xf32>
    %35 = vector.extract_strided_slice %23 {offsets = [0, 1], sizes = [8, 1], strides = [1, 1]} : vector<8x8xi32> to vector<8x1xi32>
    %36 = vector.broadcast %35 : vector<8x1xi32> to vector<8x128xi32>
    %37 = arith.cmpi eq, %27, %36 : vector<8x128xi32>
    %38 = arith.extui %37 : vector<8x128xi1> to vector<8x128xi32>
    %39 = arith.sitofp %38 : vector<8x128xi32> to vector<8x128xf32>
    %40 = arith.addf %34, %39 : vector<8x128xf32>
    %41 = vector.extract_strided_slice %23 {offsets = [0, 2], sizes = [8, 1], strides = [1, 1]} : vector<8x8xi32> to vector<8x1xi32>
    %42 = vector.broadcast %41 : vector<8x1xi32> to vector<8x128xi32>
    %43 = arith.cmpi eq, %27, %42 : vector<8x128xi32>
    %44 = arith.extui %43 : vector<8x128xi1> to vector<8x128xi32>
    %45 = arith.sitofp %44 : vector<8x128xi32> to vector<8x128xf32>
    %46 = arith.addf %40, %45 : vector<8x128xf32>
    %47 = vector.extract_strided_slice %23 {offsets = [0, 3], sizes = [8, 1], strides = [1, 1]} : vector<8x8xi32> to vector<8x1xi32>
    %48 = vector.broadcast %47 : vector<8x1xi32> to vector<8x128xi32>
    %49 = arith.cmpi eq, %27, %48 : vector<8x128xi32>
    %50 = arith.extui %49 : vector<8x128xi1> to vector<8x128xi32>
    %51 = arith.sitofp %50 : vector<8x128xi32> to vector<8x128xf32>
    %52 = arith.addf %46, %51 : vector<8x128xf32>
    %53 = vector.extract_strided_slice %23 {offsets = [0, 4], sizes = [8, 1], strides = [1, 1]} : vector<8x8xi32> to vector<8x1xi32>
    %54 = vector.broadcast %53 : vector<8x1xi32> to vector<8x128xi32>
    %55 = arith.cmpi eq, %27, %54 : vector<8x128xi32>
    %56 = arith.extui %55 : vector<8x128xi1> to vector<8x128xi32>
    %57 = arith.sitofp %56 : vector<8x128xi32> to vector<8x128xf32>
    %58 = arith.addf %52, %57 : vector<8x128xf32>
    %59 = vector.extract_strided_slice %23 {offsets = [0, 5], sizes = [8, 1], strides = [1, 1]} : vector<8x8xi32> to vector<8x1xi32>
    %60 = vector.broadcast %59 : vector<8x1xi32> to vector<8x128xi32>
    %61 = arith.cmpi eq, %27, %60 : vector<8x128xi32>
    %62 = arith.extui %61 : vector<8x128xi1> to vector<8x128xi32>
    %63 = arith.sitofp %62 : vector<8x128xi32> to vector<8x128xf32>
    %64 = arith.addf %58, %63 : vector<8x128xf32>
    %65 = vector.extract_strided_slice %23 {offsets = [0, 6], sizes = [8, 1], strides = [1, 1]} : vector<8x8xi32> to vector<8x1xi32>
    %66 = vector.broadcast %65 : vector<8x1xi32> to vector<8x128xi32>
    %67 = arith.cmpi eq, %27, %66 : vector<8x128xi32>
    %68 = arith.extui %67 : vector<8x128xi1> to vector<8x128xi32>
    %69 = arith.sitofp %68 : vector<8x128xi32> to vector<8x128xf32>
    %70 = arith.addf %64, %69 : vector<8x128xf32>
    %71 = vector.extract_strided_slice %23 {offsets = [0, 7], sizes = [8, 1], strides = [1, 1]} : vector<8x8xi32> to vector<8x1xi32>
    %72 = vector.broadcast %71 : vector<8x1xi32> to vector<8x128xi32>
    %73 = arith.cmpi eq, %27, %72 : vector<8x128xi32>
    %74 = arith.extui %73 : vector<8x128xi1> to vector<8x128xi32>
    %75 = arith.sitofp %74 : vector<8x128xi32> to vector<8x128xf32>
    %76 = arith.addf %70, %75 : vector<8x128xf32>
    %77 = arith.truncf %76 : vector<8x128xf32> to vector<8x128xbf16>
    %c0_9 = arith.constant 0 : index
    %c0_10 = arith.constant 0 : index
    %c0_11 = arith.constant 0 : index
    %78 = vector.load %arg4[%c0_9, %c0_10, %c0_11] : memref<1x128x128xbf16, #tpu.memory_space<vmem>>, vector<1x128x128xbf16>
    %79 = vector.shape_cast %78 : vector<1x128x128xbf16> to vector<128x128xbf16>
    %cst_12 = arith.constant dense<0.000000e+00> : vector<8x128xf32>
    %80 = tpu.matmul %77, %79, %cst_12 {dimension_numbers = #tpu.dot_dimension_numbers<[1], [0], [0], [1], [0, 0, 1, 1], [], []>} : vector<8x128xbf16>, vector<128x128xbf16>, vector<8x128xf32> -> vector<8x128xf32>
    %c0_13 = arith.constant 0 : index
    %c0_14 = arith.constant 0 : index
    %c0_15 = arith.constant 0 : index
    %81 = vector.load %arg5[%c0_13, %c0_14, %c0_15] : memref<1x8x128xf32, #tpu.memory_space<vmem>>, vector<1x8x128xf32>
    %82 = vector.shape_cast %81 : vector<1x8x128xf32> to vector<8x128xf32>
    %83 = vector.shape_cast %80 : vector<8x128xf32> to vector<1x8x128xf32>
    tpu.vector_store %arg5[%c0_13, %c0_14, %c0_15], %83 {strides = array<i32>} : memref<1x8x128xf32, #tpu.memory_space<vmem>>, vector<1x8x128xf32>,
    return
  }
  func.func @transform_0(%arg0: i32, %arg1: i32, %arg2: memref<2xi32, #tpu.memory_space<smem>>) -> (i32, i32, i32) {
    %c0_i32 = arith.constant 0 : i32
    %c0_i32_0 = arith.constant 0 : i32
    return %arg0, %arg1, %c0_i32 : i32, i32, i32
  }
  func.func @transform_1(%arg0: i32, %arg1: i32, %arg2: memref<2xi32, #tpu.memory_space<smem>>) -> (i32, i32, i32) {
    %c0_i32 = arith.constant 0 : i32
    %c0_i32_0 = arith.constant 0 : i32
    %c0_i32_1 = arith.constant 0 : i32
    return %arg0, %c0_i32, %c0_i32_0 : i32, i32, i32
  }
  func.func @transform_2(%arg0: i32, %arg1: i32, %arg2: memref<2xi32, #tpu.memory_space<smem>>) -> (i32, i32, i32) {
    %c0_i32 = arith.constant 0 : i32
    %c0_i32_0 = arith.constant 0 : i32
    return %arg0, %arg1, %c0_i32 : i32, i32, i32
  }
  func.func @transform_3(%arg0: i32, %arg1: i32, %arg2: memref<2xi32, #tpu.memory_space<smem>>) -> (i32, i32, i32) {
    %c0_i32 = arith.constant 0 : i32
    %c0_i32_0 = arith.constant 0 : i32
    return %arg0, %arg1, %c0_i32 : i32, i32, i32
  }
}

</mosaic_0001>

<llo_original>
// kernel: tpu_custom_call.1
$region0: #{tpu_custom_call.1}
  #allocation0 [shape = 'u32[]', space=smem, size = 0x4, offset = 0x4, fixed_abs, tag = 'smem constant byte address 0x4 - core index']
  #allocation1 [shape = 'u32[144,128]{1,0:T(1,128)}', space=vmem, size = 0x12000, scoped, tag = 'internal scratch']
  #allocation2 [shape = 's32[1]{0}', space=sflag, size = 0x4, scoped, tag = 'scoped memory for tpu_custom_call.1']
  #allocation3 [shape = 'u8[512]{0}', space=smem, size = 0x200, scoped, tag = 'prefetched SMEM operand 0']
  %s0 = inlined_call_operand.hbm [shape: s32[2], index: 0, kind: input, shape index: {}]
  %s1 = inlined_call_operand.hbm [shape: s32[2,8,8], index: 1, kind: input, shape index: {}]
  %s2 = inlined_call_operand.hbm [shape: bf16[2,128,128], index: 2, kind: input, shape index: {}]
  %s3 = inlined_call_operand.hbm [shape: f32[2,8,128], index: 3, kind: output, shape index: {0}]
  %s4 = inlined_call_operand.hbm [shape: s32[2,8,8], index: 4, kind: output, shape index: {1}]
  %5 = xla_tuple %s3, %s4
  %s6 = sld [smem:[#allocation0]]
  $region57: #{tpu_custom_call.1} parent=0
    _
  %s8 = ssub.s32 1, %s6
  %s9 = scalar_select 0, %s8, %s6
  %11 = dma.hbm_to_smem %s0, 16, [#allocation3], [#allocation2]
  %12 = dma.done [#allocation2], 16
  %13 = sfence
  $region1: #{tpu_custom_call.1} parent=0
    #allocation4 [shape = 'u8[8192]{0}', space=vmem, size = 0x2000, scoped, tag = 'input window, operand 1']
    #allocation5 [shape = 's32[2]{0}', space=sflag, size = 0x8, scoped, tag = 'scoped memory for tpu_custom_call.1']
    #allocation6 [shape = 's32[2]{0}', space=sflag, size = 0x8, scoped, tag = 'scoped memory for tpu_custom_call.1']
    #allocation7 [shape = 'u8[65536]{0}', space=vmem, size = 0x10000, scoped, tag = 'input window, operand 2']
    #allocation8 [shape = 's32[2]{0}', space=sflag, size = 0x8, scoped, tag = 'scoped memory for tpu_custom_call.1']
    #allocation9 [shape = 'u8[8192]{0}', space=vmem, size = 0x2000, scoped, tag = 'output window, operand 0']
    #allocation10 [shape = 'u8[8192]{0}', space=vmem, size = 0x2000, scoped, tag = 'output window, operand 1']
    #allocation11 [shape = 's32[2]{0}', space=sflag, size = 0x8, scoped, tag = 'scoped memory for tpu_custom_call.1']
    %14 = vsyncpa [#allocation5], 0
    %s15 = scalar_lea.sflag [#allocation5], 1
    %16 = vsyncpa %s15, 0
    %17 = vsyncpa [#allocation8], 0
    %s18 = scalar_lea.sflag [#allocation8], 1
    %19 = vsyncpa %s18, 0
    %20 = vsyncpa [#allocation6], 0
    %s21 = scalar_lea.sflag [#allocation6], 1
    %22 = vsyncpa %s21, 0
    %23 = vsyncpa [#allocation11], 0
    %s24 = scalar_lea.sflag [#allocation11], 1
    %25 = vsyncpa %s24, 0
    loop: start=0, step=1, limit=4
    $region2: #{tpu_custom_call.1} parent=1 // loop_pre_header
      _
    $region3: #{tpu_custom_call.1} parent=1 // loop_header
      %s27 = sphi 0, %s31
      %p28 = scmp.ge.s32.totalorder %s27, 4
      %s34 = sphi 0, %s46
      %s35 = sphi 0, %s42
      %s36 = sphi 0, %s34
      %s37 = sphi 0, %s35
      %s38 = sphi 0, %s36
      %s39 = sphi 0, %s37
      %s51 = sphi 0, %s53
      %s54 = sphi 0, %s51
      %s55 = sphi 0, %s54
      %s71 = sphi 0, %s55
      %s77 = sphi 0, %s79
      %s80 = sphi 0, %s77
      %s81 = sphi 0, %s80
      %s97 = sphi 0, %s81
      %s105 = sphi 0, %s107
      %s108 = sphi 0, %s105
      %s109 = sphi 0, %s108
      %s125 = sphi 0, %s109
      %s133 = sphi 0, %s135
      %s136 = sphi 0, %s133
      %s137 = sphi 0, %s136
      %s153 = sphi 0, %s137
    $region4: #{tpu_custom_call.1} parent=1 // loop_header_branch
      %30 = sbr.rel (%p28) target = $region8
    $region5: #{tpu_custom_call.1} parent=1 // loop_body
      %s32 = ssub.s32 %s27, 1
      %s33 = ssub.s32 %s27, 2
      %s40 = sadd.s32 1, %s35
      %p41 = scmp.ge.s32.totalorder %s40, 1
      %s42 = scalar_select %p41, 0, %s40
      %s43 = sadd.s32 1, %s34
      %s44 = scalar_select %p41, %s43, %s34
      %p45 = scmp.ge.s32.totalorder %s44, 2
      %s46 = scalar_select %p45, 0, %s44
      %s47 = ssub.s32 %s34, %s46
      %s48 = ssub.s32 %s35, %s42
      %s49 = sor.u32 %s47, %s48
      %p50 = scmp.eq.s32.totalorder %s49, 0
      %s52 = sadd.s32 %s51, 1
      %s53 = scalar_select %p50, %s51, %s52
      %p56 = pneg %p50
      %p57 = scmp.eq.s32.totalorder %s27, 1
      %p58 = por %p56, %p57
      %p59 = scmp.ne.s32.totalorder %s51, %s54
      %p60 = scmp.eq.s32.totalorder %s27, 0
      %p61 = por %p59, %p60
      %p62 = scmp.ne.s32.totalorder %s51, %s54
      %p63 = scmp.eq.s32.totalorder %s32, 1
      %p64 = por %p62, %p63
      %p65 = scmp.ne.s32.totalorder %s54, %s55
      %p66 = scmp.eq.s32.totalorder %s32, 0
      %p67 = por %p65, %p66
      %p68 = scmp.ne.s32.totalorder %s54, %s55
      %p69 = scmp.eq.s32.totalorder %s33, 1
      %p70 = por %p68, %p69
      %p72 = scmp.ne.s32.totalorder %s55, %s71
      %p73 = scmp.eq.s32.totalorder %s33, 0
      %p74 = por %p72, %p73
      %s75 = ssub.s32 %s34, %s46
      %p76 = scmp.eq.s32.totalorder %s75, 0
      %s78 = sadd.s32 %s77, 1
      %s79 = scalar_select %p76, %s77, %s78
      %p82 = pneg %p76
      %p83 = scmp.eq.s32.totalorder %s27, 1
      %p84 = por %p82, %p83
      %p85 = scmp.ne.s32.totalorder %s77, %s80
      %p86 = scmp.eq.s32.totalorder %s27, 0
      %p87 = por %p85, %p86
      %p88 = scmp.ne.s32.totalorder %s77, %s80
      %p89 = scmp.eq.s32.totalorder %s32, 1
      %p90 = por %p88, %p89
      %p91 = scmp.ne.s32.totalorder %s80, %s81
      %p92 = scmp.eq.s32.totalorder %s32, 0
      %p93 = por %p91, %p92
      %p94 = scmp.ne.s32.totalorder %s80, %s81
      %p95 = scmp.eq.s32.totalorder %s33, 1
      %p96 = por %p94, %p95
      %p98 = scmp.ne.s32.totalorder %s81, %s97
      %p99 = scmp.eq.s32.totalorder %s33, 0
      %p100 = por %p98, %p99
      %s101 = ssub.s32 %s34, %s46
      %s102 = ssub.s32 %s35, %s42
      %s103 = sor.u32 %s101, %s102
      %p104 = scmp.eq.s32.totalorder %s103, 0
      %s106 = sadd.s32 %s105, 1
      %s107 = scalar_select %p104, %s105, %s106
      %p110 = pneg %p104
      %p111 = scmp.eq.s32.totalorder %s27, 1
      %p112 = por %p110, %p111
      %p113 = scmp.ne.s32.totalorder %s105, %s108
      %p114 = scmp.eq.s32.totalorder %s27, 0
      %p115 = por %p113, %p114
      %p116 = scmp.ne.s32.totalorder %s105, %s108
      %p117 = scmp.eq.s32.totalorder %s32, 1
      %p118 = por %p116, %p117
      %p119 = scmp.ne.s32.totalorder %s108, %s109
      %p120 = scmp.eq.s32.totalorder %s32, 0
      %p121 = por %p119, %p120
      %p122 = scmp.ne.s32.totalorder %s108, %s109
      %p123 = scmp.eq.s32.totalorder %s33, 1
      %p124 = por %p122, %p123
      %p126 = scmp.ne.s32.totalorder %s109, %s125
      %p127 = scmp.eq.s32.totalorder %s33, 0
      %p128 = por %p126, %p127
      %s129 = ssub.s32 %s34, %s46
      %s130 = ssub.s32 %s35, %s42
      %s131 = sor.u32 %s129, %s130
      %p132 = scmp.eq.s32.totalorder %s131, 0
      %s134 = sadd.s32 %s133, 1
      %s135 = scalar_select %p132, %s133, %s134
      %p138 = pneg %p132
      %p139 = scmp.eq.s32.totalorder %s27, 1
      %p140 = por %p138, %p139
      %p141 = scmp.ne.s32.totalorder %s133, %s136
      %p142 = scmp.eq.s32.totalorder %s27, 0
      %p143 = por %p141, %p142
      %p144 = scmp.ne.s32.totalorder %s133, %s136
      %p145 = scmp.eq.s32.totalorder %s32, 1
      %p146 = por %p144, %p145
      %p147 = scmp.ne.s32.totalorder %s136, %s137
      %p148 = scmp.eq.s32.totalorder %s32, 0
      %p149 = por %p147, %p148
      %p150 = scmp.ne.s32.totalorder %s136, %s137
      %p151 = scmp.eq.s32.totalorder %s33, 1
      %p152 = por %p150, %p151
      %p154 = scmp.ne.s32.totalorder %s137, %s153
      %p155 = scmp.eq.s32.totalorder %s33, 0
      %p156 = por %p154, %p155
      %p157 = scmp.le.s32.totalorder 1, %s27
      %p158 = scmp.lt.s32.totalorder %s27, 3
      %p159 = pnand %p157, %p158
      %p160 = pneg %p159
      // Predicated region
      $region9: #{tpu_custom_call.1} parent=5 // pred_check
        _
      $region10: #{tpu_custom_call.1} parent=5 // pred_check_branch
        %162 = sbr.rel (%p159) target = $region12
      $region11: #{tpu_custom_call.1} parent=5 // pred_region
        %s163 = ssub.s32 %s27, 1
      $region12: #{tpu_custom_call.1} parent=5 // pred_fallthru
        _
      %p164 = scmp.lt.s32.totalorder %s27, 2
      // Predicated region
      $region13: #{tpu_custom_call.1} parent=5 // pred_check
        %p165 = pneg %p164
      $region14: #{tpu_custom_call.1} parent=5 // pred_check_branch
        %167 = sbr.rel (%p165) target = $region16
      $region15: #{tpu_custom_call.1} parent=5 // pred_region
        // Predicated region
        $region17: #{tpu_custom_call.1} parent=15 // pred_check
          %p168 = pneg %p61
        $region18: #{tpu_custom_call.1} parent=15 // pred_check_branch
          %170 = sbr.rel (%p168) target = $region20
        $region19: #{tpu_custom_call.1} parent=15 // pred_region
          %s171 = sand.u32 %s51, 1
          %s172 = scalar_lea.sflag [#allocation5], %s171
          %s173 = sand.u32 %s51, 1
          %s174 = smul.addr %s173, 8
          %s175 = scalar_lea.vmem [#allocation4], %s174
          %s177 = ssub.s32 128, 128
          %178 = vsyncadd %s172, %s177
          %s179 = sadd.s32 %s35, %s34
          %s180 = smul.addr %s179, 128
          %s181 = scalar_lea.hbm %s1, %s180
          %s183 = sshll.u32 %s175, 4
          %s184 = int_to_ptr.vmem [resolvable:$true] %s183
          %186 = dma.hbm_to_vmem [thread:$0]  %s181, 128, %s184, %s172
        $region20: #{tpu_custom_call.1} parent=15 // pred_fallthru
          _
        // Predicated region
        $region21: #{tpu_custom_call.1} parent=15 // pred_check
          %p187 = pneg %p87
        $region22: #{tpu_custom_call.1} parent=15 // pred_check_branch
          %189 = sbr.rel (%p187) target = $region24
        $region23: #{tpu_custom_call.1} parent=15 // pred_region
          %s190 = sand.u32 %s77, 1
          %s191 = scalar_lea.sflag [#allocation8], %s190
          %s192 = sand.u32 %s77, 1
          %s193 = smul.addr %s192, 64
          %s194 = scalar_lea.vmem [#allocation7], %s193
          %s196 = ssub.s32 1024, 1024
          %197 = vsyncadd %s191, %s196
          %s198 = smul.addr %s34, 16
          %s199 = smul.addr %s198, 64
          %s200 = scalar_lea.hbm %s2, %s199
          %s201 = sshll.u32 %s194, 4
          %s202 = int_to_ptr.vmem [resolvable:$true] %s201
          %207 = dma.hbm_to_vmem [thread:$0]  %s200, 1024, %s202, %s191, 64, 64, 4
        $region24: #{tpu_custom_call.1} parent=15 // pred_fallthru
          _
      $region16: #{tpu_custom_call.1} parent=5 // pred_fallthru
        _
      %p208 = scmp.le.s32.totalorder 1, %s27
      %p209 = scmp.lt.s32.totalorder %s27, 3
      %p210 = pnand %p208, %p209
      %p211 = pneg %p210
      // Predicated region
      $region25: #{tpu_custom_call.1} parent=5 // pred_check
        _
      $region26: #{tpu_custom_call.1} parent=5 // pred_check_branch
        %213 = sbr.rel (%p210) target = $region28
      $region27: #{tpu_custom_call.1} parent=5 // pred_region
        %s214 = ssub.s32 %s27, 1
        %s215 = sand.u32 %s54, 1
        %s216 = scalar_lea.sflag [#allocation5], %s215
        %s217 = sand.u32 %s54, 1
        %s218 = smul.addr %s217, 8
        %s219 = scalar_lea.vmem [#allocation4], %s218
        // Predicated region
        $region29: #{tpu_custom_call.1} parent=27 // pred_check
          %p220 = pneg %p67
        $region30: #{tpu_custom_call.1} parent=27 // pred_check_branch
          %222 = sbr.rel (%p220) target = $region32
        $region31: #{tpu_custom_call.1} parent=27 // pred_region
          %223 = dma.done %s216, 128
        $region32: #{tpu_custom_call.1} parent=27 // pred_fallthru
          _
        %s224 = sand.u32 %s80, 1
        %s225 = scalar_lea.sflag [#allocation8], %s224
        %s226 = sand.u32 %s80, 1
        %s227 = smul.addr %s226, 64
        %s228 = scalar_lea.vmem [#allocation7], %s227
        // Predicated region
        $region33: #{tpu_custom_call.1} parent=27 // pred_check
          %p229 = pneg %p93
        $region34: #{tpu_custom_call.1} parent=27 // pred_check_branch
          %231 = sbr.rel (%p229) target = $region36
        $region35: #{tpu_custom_call.1} parent=27 // pred_region
          %232 = dma.done %s225, 1024
        $region36: #{tpu_custom_call.1} parent=27 // pred_fallthru
          _
        %s233 = sand.u32 %s54, 1
        %s234 = scalar_lea.sflag [#allocation5], %s233
        %s235 = sand.u32 %s54, 1
        %s236 = smul.addr %s235, 8
        %s237 = scalar_lea.vmem [#allocation4], %s236
        %p238 = pneg %p67
        %p239 = pneg %p64
        %s240 = sand.u32 %s80, 1
        %s241 = scalar_lea.sflag [#allocation8], %s240
        %s242 = sand.u32 %s80, 1
        %s243 = smul.addr %s242, 64
        %s244 = scalar_lea.vmem [#allocation7], %s243
        %p245 = pneg %p93
        %p246 = pneg %p90
        %p247 = pneg %p121
        %p248 = pneg %p118
        %s249 = sand.u32 %s108, 1
        %s250 = scalar_lea.sflag [#allocation6], %s249
        %s251 = sand.u32 %s108, 1
        %s252 = smul.addr %s251, 8
        %s253 = scalar_lea.vmem [#allocation9], %s252
        %p254 = pneg %p149
        %p255 = pneg %p146
        %s256 = sand.u32 %s136, 1
        %s257 = scalar_lea.sflag [#allocation11], %s256
        %s258 = sand.u32 %s136, 1
        %s259 = smul.addr %s258, 8
        %s260 = scalar_lea.vmem [#allocation10], %s259
        %s262 = sld [smem:[#allocation3 + %s36]]
        %v263 = vld [vmem:[%s219] sm:$0xff]
        %vm264 = vcmp.ge.s32.totalorder %v263, 0
        %p265 = scmp.eq.s32.totalorder %s262, 0
        %s266 = scalar_select %p265, 1, %s262
        %v267 = vstv %s266
        %vm268 = vcmp.lt.s32.totalorder %v263, 0
        %v269 = vsub.s32 0, %v263
        %v270 = vsel %vm268, %v269, %v263
        %vm271 = vcmp.lt.s32.totalorder %v267, 0
        %v272 = vsub.s32 0, %v267
        %v273 = vsel %vm271, %v272, %v267
        %v274 = vshrl.u32 %v270, 31
        %v276 = vor.u32 0, %v274
        %v277 = vshll.u32 %v270, 1
        %vm278 = vcmp.ge.u32.totalorder %v276, %v273
        %v279 = vsub.s32 %v276, %v273
        %v280 = vsel %vm278, %v279, %v276
        %v281 = vadd.s32 %v277, 1
        %v282 = vsel %vm278, %v281, %v277
        %v283 = vshrl.u32 %v282, 31
        %v284 = vshll.u32 %v280, 1
        %v285 = vor.u32 %v284, %v283
        %v286 = vshll.u32 %v282, 1
        %vm287 = vcmp.ge.u32.totalorder %v285, %v273
        %v288 = vsub.s32 %v285, %v273
        %v289 = vsel %vm287, %v288, %v285
        %v290 = vadd.s32 %v286, 1
        %v291 = vsel %vm287, %v290, %v286
        %v292 = vshrl.u32 %v291, 31
        %v293 = vshll.u32 %v289, 1
        %v294 = vor.u32 %v293, %v292
        %v295 = vshll.u32 %v291, 1
        %vm296 = vcmp.ge.u32.totalorder %v294, %v273
        %v297 = vsub.s32 %v294, %v273
        %v298 = vsel %vm296, %v297, %v294
        %v299 = vadd.s32 %v295, 1
        %v300 = vsel %vm296, %v299, %v295
        %v301 = vshrl.u32 %v300, 31
        %v302 = vshll.u32 %v298, 1
        %v303 = vor.u32 %v302, %v301
        %v304 = vshll.u32 %v300, 1
        %vm305 = vcmp.ge.u32.totalorder %v303, %v273
        %v306 = vsub.s32 %v303, %v273
        %v307 = vsel %vm305, %v306, %v303
        %v308 = vadd.s32 %v304, 1
        %v309 = vsel %vm305, %v308, %v304
        %v310 = vshrl.u32 %v309, 31
        %v311 = vshll.u32 %v307, 1
        %v312 = vor.u32 %v311, %v310
        %v313 = vshll.u32 %v309, 1
        %vm314 = vcmp.ge.u32.totalorder %v312, %v273
        %v315 = vsub.s32 %v312, %v273
        %v316 = vsel %vm314, %v315, %v312
        %v317 = vadd.s32 %v313, 1
        %v318 = vsel %vm314, %v317, %v313
        %v319 = vshrl.u32 %v318, 31
        %v320 = vshll.u32 %v316, 1
        %v321 = vor.u32 %v320, %v319
        %v322 = vshll.u32 %v318, 1
        %vm323 = vcmp.ge.u32.totalorder %v321, %v273
        %v324 = vsub.s32 %v321, %v273
        %v325 = vsel %vm323, %v324, %v321
        %v326 = vadd.s32 %v322, 1
        %v327 = vsel %vm323, %v326, %v322
        %v328 = vshrl.u32 %v327, 31
        %v329 = vshll.u32 %v325, 1
        %v330 = vor.u32 %v329, %v328
        %v331 = vshll.u32 %v327, 1
        %vm332 = vcmp.ge.u32.totalorder %v330, %v273
        %v333 = vsub.s32 %v330, %v273
        %v334 = vsel %vm332, %v333, %v330
        %v335 = vadd.s32 %v331, 1
        %v336 = vsel %vm332, %v335, %v331
        %v337 = vshrl.u32 %v336, 31
        %v338 = vshll.u32 %v334, 1
        %v339 = vor.u32 %v338, %v337
        %v340 = vshll.u32 %v336, 1
        %vm341 = vcmp.ge.u32.totalorder %v339, %v273
        %v342 = vsub.s32 %v339, %v273
        %v343 = vsel %vm341, %v342, %v339
        %v344 = vadd.s32 %v340, 1
        %v345 = vsel %vm341, %v344, %v340
        %v346 = vshrl.u32 %v345, 31
        %v347 = vshll.u32 %v343, 1
        %v348 = vor.u32 %v347, %v346
        %v349 = vshll.u32 %v345, 1
        %vm350 = vcmp.ge.u32.totalorder %v348, %v273
        %v351 = vsub.s32 %v348, %v273
        %v352 = vsel %vm350, %v351, %v348
        %v353 = vadd.s32 %v349, 1
        %v354 = vsel %vm350, %v353, %v349
        %v355 = vshrl.u32 %v354, 31
        %v356 = vshll.u32 %v352, 1
        %v357 = vor.u32 %v356, %v355
        %v358 = vshll.u32 %v354, 1
        %vm359 = vcmp.ge.u32.totalorder %v357, %v273
        %v360 = vsub.s32 %v357, %v273
        %v361 = vsel %vm359, %v360, %v357
        %v362 = vadd.s32 %v358, 1
        %v363 = vsel %vm359, %v362, %v358
        %v364 = vshrl.u32 %v363, 31
        %v365 = vshll.u32 %v361, 1
        %v366 = vor.u32 %v365, %v364
        %v367 = vshll.u32 %v363, 1
        %vm368 = vcmp.ge.u32.totalorder %v366, %v273
        %v369 = vsub.s32 %v366, %v273
        %v370 = vsel %vm368, %v369, %v366
        %v371 = vadd.s32 %v367, 1
        %v372 = vsel %vm368, %v371, %v367
        %v373 = vshrl.u32 %v372, 31
        %v374 = vshll.u32 %v370, 1
        %v375 = vor.u32 %v374, %v373
        %v376 = vshll.u32 %v372, 1
        %vm377 = vcmp.ge.u32.totalorder %v375, %v273
        %v378 = vsub.s32 %v375, %v273
        %v379 = vsel %vm377, %v378, %v375
        %v380 = vadd.s32 %v376, 1
        %v381 = vsel %vm377, %v380, %v376
        %v382 = vshrl.u32 %v381, 31
        %v383 = vshll.u32 %v379, 1
        %v384 = vor.u32 %v383, %v382
        %v385 = vshll.u32 %v381, 1
        %vm386 = vcmp.ge.u32.totalorder %v384, %v273
        %v387 = vsub.s32 %v384, %v273
        %v388 = vsel %vm386, %v387, %v384
        %v389 = vadd.s32 %v385, 1
        %v390 = vsel %vm386, %v389, %v385
        %v391 = vshrl.u32 %v390, 31
        %v392 = vshll.u32 %v388, 1
        %v393 = vor.u32 %v392, %v391
        %v394 = vshll.u32 %v390, 1
        %vm395 = vcmp.ge.u32.totalorder %v393, %v273
        %v396 = vsub.s32 %v393, %v273
        %v397 = vsel %vm395, %v396, %v393
        %v398 = vadd.s32 %v394, 1
        %v399 = vsel %vm395, %v398, %v394
        %v400 = vshrl.u32 %v399, 31
        %v401 = vshll.u32 %v397, 1
        %v402 = vor.u32 %v401, %v400
        %v403 = vshll.u32 %v399, 1
        %vm404 = vcmp.ge.u32.totalorder %v402, %v273
        %v405 = vsub.s32 %v402, %v273
        %v406 = vsel %vm404, %v405, %v402
        %v407 = vadd.s32 %v403, 1
        %v408 = vsel %vm404, %v407, %v403
        %v409 = vshrl.u32 %v408, 31
        %v410 = vshll.u32 %v406, 1
        %v411 = vor.u32 %v410, %v409
        %v412 = vshll.u32 %v408, 1
        %vm413 = vcmp.ge.u32.totalorder %v411, %v273
        %v414 = vsub.s32 %v411, %v273
        %v415 = vsel %vm413, %v414, %v411
        %v416 = vadd.s32 %v412, 1
        %v417 = vsel %vm413, %v416, %v412
        %v418 = vshrl.u32 %v417, 31
        %v419 = vshll.u32 %v415, 1
        %v420 = vor.u32 %v419, %v418
        %v421 = vshll.u32 %v417, 1
        %vm422 = vcmp.ge.u32.totalorder %v420, %v273
        %v423 = vsub.s32 %v420, %v273
        %v424 = vsel %vm422, %v423, %v420
        %v425 = vadd.s32 %v421, 1
        %v426 = vsel %vm422, %v425, %v421
        %v427 = vshrl.u32 %v426, 31
        %v428 = vshll.u32 %v424, 1
        %v429 = vor.u32 %v428, %v427
        %v430 = vshll.u32 %v426, 1
        %vm431 = vcmp.ge.u32.totalorder %v429, %v273
        %v432 = vsub.s32 %v429, %v273
        %v433 = vsel %vm431, %v432, %v429
        %v434 = vadd.s32 %v430, 1
        %v435 = vsel %vm431, %v434, %v430
        %v436 = vshrl.u32 %v435, 31
        %v437 = vshll.u32 %v433, 1
        %v438 = vor.u32 %v437, %v436
        %v439 = vshll.u32 %v435, 1
        %vm440 = vcmp.ge.u32.totalorder %v438, %v273
        %v441 = vsub.s32 %v438, %v273
        %v442 = vsel %vm440, %v441, %v438
        %v443 = vadd.s32 %v439, 1
        %v444 = vsel %vm440, %v443, %v439
        %v445 = vshrl.u32 %v444, 31
        %v446 = vshll.u32 %v442, 1
        %v447 = vor.u32 %v446, %v445
        %v448 = vshll.u32 %v444, 1
        %vm449 = vcmp.ge.u32.totalorder %v447, %v273
        %v450 = vsub.s32 %v447, %v273
        %v451 = vsel %vm449, %v450, %v447
        %v452 = vadd.s32 %v448, 1
        %v453 = vsel %vm449, %v452, %v448
        %v454 = vshrl.u32 %v453, 31
        %v455 = vshll.u32 %v451, 1
        %v456 = vor.u32 %v455, %v454
        %v457 = vshll.u32 %v453, 1
        %vm458 = vcmp.ge.u32.totalorder %v456, %v273
        %v459 = vsub.s32 %v456, %v273
        %v460 = vsel %vm458, %v459, %v456
        %v461 = vadd.s32 %v457, 1
        %v462 = vsel %vm458, %v461, %v457
        %v463 = vshrl.u32 %v462, 31
        %v464 = vshll.u32 %v460, 1
        %v465 = vor.u32 %v464, %v463
        %v466 = vshll.u32 %v462, 1
        %vm467 = vcmp.ge.u32.totalorder %v465, %v273
        %v468 = vsub.s32 %v465, %v273
        %v469 = vsel %vm467, %v468, %v465
        %v470 = vadd.s32 %v466, 1
        %v471 = vsel %vm467, %v470, %v466
        %v472 = vshrl.u32 %v471, 31
        %v473 = vshll.u32 %v469, 1
        %v474 = vor.u32 %v473, %v472
        %v475 = vshll.u32 %v471, 1
        %vm476 = vcmp.ge.u32.totalorder %v474, %v273
        %v477 = vsub.s32 %v474, %v273
        %v478 = vsel %vm476, %v477, %v474
        %v479 = vadd.s32 %v475, 1
        %v480 = vsel %vm476, %v479, %v475
        %v481 = vshrl.u32 %v480, 31
        %v482 = vshll.u32 %v478, 1
        %v483 = vor.u32 %v482, %v481
        %v484 = vshll.u32 %v480, 1
        %vm485 = vcmp.ge.u32.totalorder %v483, %v273
        %v486 = vsub.s32 %v483, %v273
        %v487 = vsel %vm485, %v486, %v483
        %v488 = vadd.s32 %v484, 1
        %v489 = vsel %vm485, %v488, %v484
        %v490 = vshrl.u32 %v489, 31
        %v491 = vshll.u32 %v487, 1
        %v492 = vor.u32 %v491, %v490
        %v493 = vshll.u32 %v489, 1
        %vm494 = vcmp.ge.u32.totalorder %v492, %v273
        %v495 = vsub.s32 %v492, %v273
        %v496 = vsel %vm494, %v495, %v492
        %v497 = vadd.s32 %v493, 1
        %v498 = vsel %vm494, %v497, %v493
        %v499 = vshrl.u32 %v498, 31
        %v500 = vshll.u32 %v496, 1
        %v501 = vor.u32 %v500, %v499
        %v502 = vshll.u32 %v498, 1
        %vm503 = vcmp.ge.u32.totalorder %v501, %v273
        %v504 = vsub.s32 %v501, %v273
        %v505 = vsel %vm503, %v504, %v501
        %v506 = vadd.s32 %v502, 1
        %v507 = vsel %vm503, %v506, %v502
        %v508 = vshrl.u32 %v507, 31
        %v509 = vshll.u32 %v505, 1
        %v510 = vor.u32 %v509, %v508
        %v511 = vshll.u32 %v507, 1
        %vm512 = vcmp.ge.u32.totalorder %v510, %v273
        %v513 = vsub.s32 %v510, %v273
        %v514 = vsel %vm512, %v513, %v510
        %v515 = vadd.s32 %v511, 1
        %v516 = vsel %vm512, %v515, %v511
        %v517 = vshrl.u32 %v516, 31
        %v518 = vshll.u32 %v514, 1
        %v519 = vor.u32 %v518, %v517
        %v520 = vshll.u32 %v516, 1
        %vm521 = vcmp.ge.u32.totalorder %v519, %v273
        %v522 = vsub.s32 %v519, %v273
        %v523 = vsel %vm521, %v522, %v519
        %v524 = vadd.s32 %v520, 1
        %v525 = vsel %vm521, %v524, %v520
        %v526 = vshrl.u32 %v525, 31
        %v527 = vshll.u32 %v523, 1
        %v528 = vor.u32 %v527, %v526
        %v529 = vshll.u32 %v525, 1
        %vm530 = vcmp.ge.u32.totalorder %v528, %v273
        %v531 = vsub.s32 %v528, %v273
        %v532 = vsel %vm530, %v531, %v528
        %v533 = vadd.s32 %v529, 1
        %v534 = vsel %vm530, %v533, %v529
        %v535 = vshrl.u32 %v534, 31
        %v536 = vshll.u32 %v532, 1
        %v537 = vor.u32 %v536, %v535
        %v538 = vshll.u32 %v534, 1
        %vm539 = vcmp.ge.u32.totalorder %v537, %v273
        %v540 = vsub.s32 %v537, %v273
        %v541 = vsel %vm539, %v540, %v537
        %v542 = vadd.s32 %v538, 1
        %v543 = vsel %vm539, %v542, %v538
        %v544 = vshrl.u32 %v543, 31
        %v545 = vshll.u32 %v541, 1
        %v546 = vor.u32 %v545, %v544
        %v547 = vshll.u32 %v543, 1
        %vm548 = vcmp.ge.u32.totalorder %v546, %v273
        %v549 = vsub.s32 %v546, %v273
        %v550 = vsel %vm548, %v549, %v546
        %v551 = vadd.s32 %v547, 1
        %v552 = vsel %vm548, %v551, %v547
        %v553 = vshrl.u32 %v552, 31
        %v554 = vshll.u32 %v550, 1
        %v555 = vor.u32 %v554, %v553
        %v556 = vshll.u32 %v552, 1
        %vm557 = vcmp.ge.u32.totalorder %v555, %v273
        %v558 = vsub.s32 %v555, %v273
        %v559 = vsel %vm557, %v558, %v555
        %v560 = vadd.s32 %v556, 1
        %v561 = vsel %vm557, %v560, %v556
        %v562 = vsub.s32 0, %v559
        %v563 = vsel %vm268, %v562, %v559
        %vm564 = vcmp.ne.s32.totalorder %v563, 0
        %vm565 = vcmp.lt.s32.totalorder %v563, 0
        %p566 = scmp.lt.s32.totalorder %s266, 0
        %s567 = scalar_select %p566, 1, 0
        %v568 = vstv %s567
        %vm569 = vcmp.eq.s32.totalorder %v568, 1
        %vm570 = vmxor %vm565, %vm569
        %vm571 = vmand %vm570, %vm564
        %v572 = vadd.s32 %v563, %v267
        %v573 = vsel %vm571, %v572, %v563
        %v574 = vsel %vm264, %v573, 4294967295
        %vm575 = vcmask 64512
        %576 = vst.msk [vmem:[%s260] sm:$0xff] %vm575, %v574
        %v577 = vlaneseq
        %v578 = vand.u32 %v577, 127
        %579 = vset.pattern.permute.xlu0 0
        %580 = vperm.xlu0 %579, %v574
        %v581 = vpop.permute.xlu0 %580
        %vm582 = vcmp.eq.s32.totalorder %v578, %v581
        %v583 = vsel %vm582, 1, 0
        %v584 = vcvt.s32.f32 %v583
        %v585 = vadd.f32 %v584, 0.0
        %586 = vset.pattern.permute.xlu0 1
        %587 = vperm.xlu0 %586, %v574
        %v588 = vpop.permute.xlu0 %587
        %vm589 = vcmp.eq.s32.totalorder %v578, %v588
        %v590 = vsel %vm589, 1, 0
        %v591 = vcvt.s32.f32 %v590
        %v592 = vadd.f32 %v585, %v591
        %593 = vset.pattern.permute.xlu0 2
        %594 = vperm.xlu0 %593, %v574
        %v595 = vpop.permute.xlu0 %594
        %vm596 = vcmp.eq.s32.totalorder %v578, %v595
        %v597 = vsel %vm596, 1, 0
        %v598 = vcvt.s32.f32 %v597
        %v599 = vadd.f32 %v592, %v598
        %600 = vset.pattern.permute.xlu0 3
        %601 = vperm.xlu0 %600, %v574
        %v602 = vpop.permute.xlu0 %601
        %vm603 = vcmp.eq.s32.totalorder %v578, %v602
        %v604 = vsel %vm603, 1, 0
        %v605 = vcvt.s32.f32 %v604
        %v606 = vadd.f32 %v599, %v605
        %607 = vset.pattern.permute.xlu0 4
        %608 = vperm.xlu0 %607, %v574
        %v609 = vpop.permute.xlu0 %608
        %vm610 = vcmp.eq.s32.totalorder %v578, %v609
        %v611 = vsel %vm610, 1, 0
        %v612 = vcvt.s32.f32 %v611
        %v613 = vadd.f32 %v606, %v612
        %614 = vset.pattern.permute.xlu0 5
        %615 = vperm.xlu0 %614, %v574
        %v616 = vpop.permute.xlu0 %615
        %vm617 = vcmp.eq.s32.totalorder %v578, %v616
        %v618 = vsel %vm617, 1, 0
        %v619 = vcvt.s32.f32 %v618
        %v620 = vadd.f32 %v613, %v619
        %621 = vset.pattern.permute.xlu0 6
        %622 = vperm.xlu0 %621, %v574
        %v623 = vpop.permute.xlu0 %622
        %vm624 = vcmp.eq.s32.totalorder %v578, %v623
        %v625 = vsel %vm624, 1, 0
        %v626 = vcvt.s32.f32 %v625
        %v627 = vadd.f32 %v620, %v626
        %628 = vset.pattern.permute.xlu0 7
        %629 = vperm.xlu0 %628, %v574
        %v630 = vpop.permute.xlu0 %629
        %vm631 = vcmp.eq.s32.totalorder %v578, %v630
        %v632 = vsel %vm631, 1, 0
        %v633 = vcvt.s32.f32 %v632
        %v634 = vadd.f32 %v627, %v633
        %v635 = vpack.c.bf16 %v634, %v634
        %v636 = vld [vmem:[%s228] sm:$0xf]
        %v637 = vld [vmem:[%s228 + $0x4] sm:$0xf]
        %v638 = vld [vmem:[%s228 + $0x8] sm:$0xf]
        %v639 = vld [vmem:[%s228 + $0xc] sm:$0xf]
        %v640 = vld [vmem:[%s228 + $0x10] sm:$0xf]
        %v641 = vld [vmem:[%s228 + $0x14] sm:$0xf]
        %v642 = vld [vmem:[%s228 + $0x18] sm:$0xf]
        %v643 = vld [vmem:[%s228 + $0x1c] sm:$0xf]
        %v644 = vld [vmem:[%s228 + $0x20] sm:$0xf]
        %v645 = vld [vmem:[%s228 + $0x24] sm:$0xf]
        %v646 = vld [vmem:[%s228 + $0x28] sm:$0xf]
        %v647 = vld [vmem:[%s228 + $0x2c] sm:$0xf]
        %v648 = vld [vmem:[%s228 + $0x30] sm:$0xf]
        %v649 = vld [vmem:[%s228 + $0x34] sm:$0xf]
        %v650 = vld [vmem:[%s228 + $0x38] sm:$0xf]
        %v651 = vld [vmem:[%s228 + $0x3c] sm:$0xf]
        %v668 = vunpack.c.l.b16 %v636
        %v669 = vunpack.c.l.b16 %v637
        %v670 = vunpack.c.l.b16 %v638
        %v671 = vunpack.c.l.b16 %v639
        %v672 = vunpack.c.l.b16 %v640
        %v673 = vunpack.c.l.b16 %v641
        %v674 = vunpack.c.l.b16 %v642
        %v675 = vunpack.c.l.b16 %v643
        %v676 = vunpack.c.l.b16 %v644
        %v677 = vunpack.c.l.b16 %v645
        %v678 = vunpack.c.l.b16 %v646
        %v679 = vunpack.c.l.b16 %v647
        %v680 = vunpack.c.l.b16 %v648
        %v681 = vunpack.c.l.b16 %v649
        %v682 = vunpack.c.l.b16 %v650
        %v683 = vunpack.c.l.b16 %v651
        %v684 = vpack.c.b16 %v669, %v668
        %v685 = vpack.c.b16 %v671, %v670
        %v686 = vpack.c.b16 %v673, %v672
        %v687 = vpack.c.b16 %v675, %v674
        %v688 = vpack.c.b16 %v677, %v676
        %v689 = vpack.c.b16 %v679, %v678
        %v690 = vpack.c.b16 %v681, %v680
        %v691 = vpack.c.b16 %v683, %v682
        %700 = vmatprep.subr.bf16.mxu0 0
        %701 = vmatpush1.bf16.msra.mxu0 %v691
        %702 = vmatprep.subr.bf16.mxu0 0
        %703 = vmatpush1.bf16.msra.mxu0 %v690
        %704 = vmatprep.subr.bf16.mxu0 0
        %705 = vmatpush1.bf16.msra.mxu0 %v689
        %706 = vmatprep.subr.bf16.mxu0 0
        %707 = vmatpush1.bf16.msra.mxu0 %v688
        %708 = vmatprep.subr.bf16.mxu0 0
        %709 = vmatpush1.bf16.msra.mxu0 %v687
        %710 = vmatprep.subr.bf16.mxu0 0
        %711 = vmatpush1.bf16.msra.mxu0 %v686
        %712 = vmatprep.subr.bf16.mxu0 0
        %713 = vmatpush1.bf16.msra.mxu0 %v685
        %714 = vmatprep.subr.bf16.mxu0 0
        %715 = vmatpush1.bf16.msra.mxu0 %v684
        %716 = vmatprep.subr.bf16.mxu0 0
        %717 = vmatpush2.bf16.msra.mxu0 0
        %718 = vmatprep.subr.bf16.mxu0 0
        %719 = vmatpush2.bf16.msra.mxu0 0
        %720 = vmatprep.subr.bf16.mxu0 0
        %721 = vmatpush2.bf16.msra.mxu0 0
        %722 = vmatprep.subr.bf16.mxu0 0
        %723 = vmatpush2.bf16.msra.mxu0 0
        %724 = vmatprep.subr.bf16.mxu0 0
        %725 = vmatpush2.bf16.msra.mxu0 0
        %726 = vmatprep.subr.bf16.mxu0 0
        %727 = vmatpush2.bf16.msra.mxu0 0
        %728 = vmatprep.subr.bf16.mxu0 0
        %729 = vmatpush2.bf16.msra.mxu0 0
        %730 = vmatprep.subr.bf16.mxu0 0
        %731 = vmatpush2.bf16.msra.mxu0 0
        %732 = vmatprep.mubr.bf16.mxu0 0
        %733 = vmatmul.mubr.bf16.gmra.mxu0 %v635
        %v734 = vpop.f32.mrf.mxu0
        %v735 = vadd.f32 0.0, %v734
        %v736 = vpop.f32.mrf.mxu0
        %v737 = vpop.f32.mrf.mxu0
        %v738 = vpop.f32.mrf.mxu0
        %739 = vdwg.mxu0
        %740 = vst [vmem:[%s253] sm:$0xff] %v735
        %s741 = sand.u32 %s108, 1
        %s742 = scalar_lea.sflag [#allocation6], %s741
        %s743 = sand.u32 %s108, 1
        %s744 = smul.addr %s743, 8
        %s745 = scalar_lea.vmem [#allocation9], %s744
        %s746 = sand.u32 %s136, 1
        %s747 = scalar_lea.sflag [#allocation11], %s746
        %s748 = sand.u32 %s136, 1
        %s749 = smul.addr %s748, 8
        %s750 = scalar_lea.vmem [#allocation10], %s749
        // Predicated region
        $region37: #{tpu_custom_call.1} parent=27 // pred_check
          %p751 = pneg %p118
        $region38: #{tpu_custom_call.1} parent=27 // pred_check_branch
          %753 = sbr.rel (%p751) target = $region40
        $region39: #{tpu_custom_call.1} parent=27 // pred_region
          %s755 = ssub.s32 128, 128
          %756 = vsyncadd %s742, %s755
          %s757 = sadd.s32 %s37, %s36
          %s758 = smul.addr %s757, 128
          %s759 = scalar_lea.hbm %s3, %s758
          %s761 = sshll.u32 %s745, 4
          %s762 = int_to_ptr.vmem [resolvable:$true] %s761
          %764 = dma.vmem_to_hbm [thread:$0]  %s762, 128, %s759, %s742
        $region40: #{tpu_custom_call.1} parent=27 // pred_fallthru
          _
        // Predicated region
        $region41: #{tpu_custom_call.1} parent=27 // pred_check
          %p765 = pneg %p146
        $region42: #{tpu_custom_call.1} parent=27 // pred_check_branch
          %767 = sbr.rel (%p765) target = $region44
        $region43: #{tpu_custom_call.1} parent=27 // pred_region
          %s769 = ssub.s32 128, 128
          %770 = vsyncadd %s747, %s769
          %s771 = sadd.s32 %s37, %s36
          %s772 = smul.addr %s771, 128
          %s773 = scalar_lea.hbm %s4, %s772
          %s775 = sshll.u32 %s750, 4
          %s776 = int_to_ptr.vmem [resolvable:$true] %s775
          %778 = dma.vmem_to_hbm [thread:$0]  %s776, 128, %s773, %s747
        $region44: #{tpu_custom_call.1} parent=27 // pred_fallthru
          _
      $region28: #{tpu_custom_call.1} parent=5 // pred_fallthru
        _
      %p779 = scmp.le.s32.totalorder 2, %s27
      // Predicated region
      $region45: #{tpu_custom_call.1} parent=5 // pred_check
        %p780 = pneg %p779
      $region46: #{tpu_custom_call.1} parent=5 // pred_check_branch
        %782 = sbr.rel (%p780) target = $region48
      $region47: #{tpu_custom_call.1} parent=5 // pred_region
        %s783 = ssub.s32 %s27, 2
        // Predicated region
        $region49: #{tpu_custom_call.1} parent=47 // pred_check
          %p784 = pneg %p124
        $region50: #{tpu_custom_call.1} parent=47 // pred_check_branch
          %786 = sbr.rel (%p784) target = $region52
        $region51: #{tpu_custom_call.1} parent=47 // pred_region
          %s787 = sand.u32 %s109, 1
          %s788 = scalar_lea.sflag [#allocation6], %s787
          %s789 = sand.u32 %s109, 1
          %s790 = smul.addr %s789, 8
          %s791 = scalar_lea.vmem [#allocation9], %s790
          %792 = dma.done %s788, 128
        $region52: #{tpu_custom_call.1} parent=47 // pred_fallthru
          _
        // Predicated region
        $region53: #{tpu_custom_call.1} parent=47 // pred_check
          %p793 = pneg %p152
        $region54: #{tpu_custom_call.1} parent=47 // pred_check_branch
          %795 = sbr.rel (%p793) target = $region56
        $region55: #{tpu_custom_call.1} parent=47 // pred_region
          %s796 = sand.u32 %s137, 1
          %s797 = scalar_lea.sflag [#allocation11], %s796
          %s798 = sand.u32 %s137, 1
          %s799 = smul.addr %s798, 8
          %s800 = scalar_lea.vmem [#allocation10], %s799
          %801 = dma.done %s797, 128
        $region56: #{tpu_custom_call.1} parent=47 // pred_fallthru
          _
      $region48: #{tpu_custom_call.1} parent=5 // pred_fallthru
        _
    $region6: #{tpu_custom_call.1} parent=1 // loop_footer
      %s31 = sadd.s32 1, %s27
    $region7: #{tpu_custom_call.1} parent=1 // loop_footer_branch
      %26 = sbr.rel target = $region3
    $region8: #{tpu_custom_call.1} parent=1 // loop_exit
      _
    %802 = vsyncpa [#allocation5], 1
    %s803 = scalar_lea.sflag [#allocation5], 1
    %804 = vsyncpa %s803, 1
    %805 = vsyncpa [#allocation8], 1
    %s806 = scalar_lea.sflag [#allocation8], 1
    %807 = vsyncpa %s806, 1
    %808 = vsyncpa [#allocation6], 1
    %s809 = scalar_lea.sflag [#allocation6], 1
    %810 = vsyncpa %s809, 1
    %811 = vsyncpa [#allocation11], 1
    %s812 = scalar_lea.sflag [#allocation11], 1
    %813 = vsyncpa %s812, 1

</llo_original>
